<compile_context>
chip_gen: v7x
topology: tpu7x:2x2x1
jax: 0.10.0
libtpu: 0.0.40
codegen_flags: <defaults>
</compile_context>

<pallas_src>
import math

import jax
import jax.numpy as jnp
from jax.experimental import pallas as pl
from jax.experimental.pallas import tpu as pltpu


def _stats_kernel(x_ref, wcat_ref, w2_ref, stats_ref):
    """Pass 1: per-tile, per-channel sum and sum-of-squares of h_nob.

    h_nob = conv2(relu(conv1(x))) + shortcut_matmul(x)  (shortcut bias omitted:
    it only shifts the per-channel mean and is re-added analytically -- and then
    cancels against the BN mean subtraction.)
    """
    cout = w2_ref.shape[0]
    x = x_ref[...]                                                      # (Cin, TP)
    # Fused conv1 + shortcut matmul (both consume x): (2*Cout, Cin) @ (Cin, TP).
    y = jnp.dot(wcat_ref[...], x, preferred_element_type=jnp.float32)   # (2*Cout, TP)
    h1 = jnp.maximum(y[:cout], 0.0)                                      # relu(conv1(x))
    h_nob = jnp.dot(w2_ref[...], h1, preferred_element_type=jnp.float32) + y[cout:]
    s = jnp.sum(h_nob, axis=-1, keepdims=True)                           # (Cout, 1)
    sq = jnp.sum(h_nob * h_nob, axis=-1, keepdims=True)                  # (Cout, 1)
    stats_ref[...] = jnp.concatenate([s, sq], axis=-1)                   # (Cout, 2)


def _norm_kernel(x_ref, wcat_ref, w2s_ref, shift_ref, o_ref):
    """Pass 2: recompute from x with BN-scale-folded weights, add folded shift."""
    cout = w2s_ref.shape[0]
    x = x_ref[...]                                                       # (Cin, TP)
    y = jnp.dot(wcat_ref[...], x, preferred_element_type=jnp.float32)    # (2*Cout, TP)
    h1 = jnp.maximum(y[:cout], 0.0)
    # w2s/ws rows are pre-scaled by gamma*inv_std; shift absorbs beta, mean, bias.
    o_ref[...] = (jnp.dot(w2s_ref[...], h1, preferred_element_type=jnp.float32)
                  + y[cout:] + shift_ref[...])                           # (Cout, TP), lane-dense


def _pick_pixel_tile(hw):
    # Largest lane-aligned tile that divides the spatial extent; full row otherwise
    # ("block equals full dim" is always legal).
    for tp in (2048, 1024, 512, 256, 128):
        if hw % tp == 0:
            return tp
    return hw


def init_params(key, n_input, n_output):
    """Deterministic parameter init mirroring the PyTorch module's __init__."""
    k1, k2, k3, k4 = jax.random.split(key, 4)

    # conv1: PyTorch Conv2d default init = kaiming_uniform(a=sqrt(5)) -> U(-1/sqrt(fan_in), +)
    b1 = 1.0 / math.sqrt(n_input)
    w1 = jax.random.uniform(k1, (n_output, n_input, 1, 1), jnp.float32, -b1, b1)

    # conv2: default Conv2d init (init_weights() is NOT called in the forward path)
    b2 = 1.0 / math.sqrt(n_output)
    w2 = jax.random.uniform(k2, (n_output, n_output, 1, 1), jnp.float32, -b2, b2)

    # shortcut: uniform(-0.01, 0.01), identity positions set to 1.0 (n_output >= n_input)
    ws = jax.random.uniform(k3, (n_output, n_input, 1, 1), jnp.float32, -0.01, 0.01)
    if n_output >= n_input:
        eye = jnp.zeros((n_output, n_input), jnp.float32)
        eye = eye.at[jnp.arange(n_input), jnp.arange(n_input)].set(1.0)
        ws = jnp.where(eye[:, :, None, None] > 0, 1.0, ws)
    # shortcut bias: default Conv2d bias init U(-1/sqrt(fan_in), +), fan_in = n_input
    bs = jax.random.uniform(k4, (n_output,), jnp.float32, -b1, b1)

    # bn_out affine params (PyTorch BatchNorm2d defaults)
    gamma = jnp.ones((n_output,), jnp.float32)
    beta = jnp.zeros((n_output,), jnp.float32)

    return {"w1": w1, "w2": w2, "ws": ws, "bs": bs, "gamma": gamma, "beta": beta}


def fake_rkhs_forward(x_nchw, params):
    N, Cin, H, W = x_nchw.shape
    Cout = params["w1"].shape[0]
    HW = H * W
    TP = _pick_pixel_tile(HW)
    num_tiles = HW // TP
    P = N * HW

    # NCHW -> (N, Cin, H*W): a free view, no transpose / extra HBM pass.
    x3 = x_nchw.reshape(N, Cin, HW).astype(jnp.float32)

    # 1x1 conv weights as (Cout, Cin) matrices; conv1 & shortcut stacked (share x).
    w1 = params["w1"].reshape(Cout, Cin)
    w2 = params["w2"].reshape(Cout, Cout)
    ws = params["ws"].reshape(Cout, Cin)
    wcat = jnp.concatenate([w1, ws], axis=0)                 # (2*Cout, Cin)

    x_spec = pl.BlockSpec((None, Cin, TP), lambda n, t: (n, 0, t))
    wcat_spec = pl.BlockSpec((2 * Cout, Cin), lambda n, t: (0, 0))
    w2_spec = pl.BlockSpec((Cout, Cout), lambda n, t: (0, 0))
    col_spec = pl.BlockSpec((Cout, 1), lambda n, t: (0, 0))

    matmul_flops = 2 * P * (Cin * 2 * Cout + Cout * Cout)
    elt_flops = 5 * P * Cout
    x_bytes = 4 * P * Cin
    out_bytes = 4 * P * Cout
    w_bytes = 4 * (wcat.size + w2.size + 2 * Cout)
    parallel2 = pltpu.CompilerParams(dimension_semantics=("parallel", "parallel"))

    # ---- pass 1: per-tile per-channel sum / sum-of-squares of h_nob ----
    stats = pl.pallas_call(
        _stats_kernel,
        out_shape=jax.ShapeDtypeStruct((N, num_tiles, Cout, 2), jnp.float32),
        grid=(N, num_tiles),
        in_specs=[x_spec, wcat_spec, w2_spec],
        out_specs=pl.BlockSpec((None, None, Cout, 2), lambda n, t: (n, t, 0, 0)),
        compiler_params=parallel2,
        cost_estimate=pl.CostEstimate(
            flops=matmul_flops + elt_flops, transcendentals=0,
            bytes_accessed=x_bytes + w_bytes + 4 * N * num_tiles * Cout * 2),
    )(x3, wcat, w2)

    # ---- tiny global combine; fold BN (and the cancelling shortcut bias) ----
    sums = jnp.sum(stats[..., 0], axis=(0, 1))               # (Cout,)
    sqs = jnp.sum(stats[..., 1], axis=(0, 1))                # (Cout,)
    mean_nob = sums / P                                      # mean without shortcut bias
    # Biased variance (training BN). Adding the per-channel shortcut bias does not
    # change the variance, and its mean shift cancels in (h_pre - mean), so the
    # bias drops out of the output entirely.
    var = jnp.maximum(sqs / P - mean_nob * mean_nob, 0.0)
    inv_std = jax.lax.rsqrt(var + 1e-5)
    scale = params["gamma"] * inv_std                        # (Cout,)
    shift = (params["beta"] - mean_nob * scale).reshape(Cout, 1)
    # Fold the per-output-channel BN scale into the weight rows feeding the output.
    wcat2 = jnp.concatenate([w1, scale[:, None] * ws], axis=0)
    w2s = scale[:, None] * w2

    # ---- pass 2: recompute, apply folded affine; output directly in NCHW ----
    out3 = pl.pallas_call(
        _norm_kernel,
        out_shape=jax.ShapeDtypeStruct((N, Cout, HW), jnp.float32),
        grid=(N, num_tiles),
        in_specs=[x_spec, wcat_spec, w2_spec, col_spec],
        out_specs=pl.BlockSpec((None, Cout, TP), lambda n, t: (n, 0, t)),
        compiler_params=parallel2,
        cost_estimate=pl.CostEstimate(
            flops=matmul_flops + 3 * P * Cout, transcendentals=0,
            bytes_accessed=x_bytes + w_bytes + out_bytes),
    )(x3, wcat2, w2s, shift)

    return out3.reshape(N, Cout, H, W)


def _reference_forward(x, params):
    """Pure-JAX reference mirroring the PyTorch module (training-mode BN)."""
    w1 = params["w1"][:, :, 0, 0]
    w2 = params["w2"][:, :, 0, 0]
    ws = params["ws"][:, :, 0, 0]
    h1 = jnp.maximum(jnp.einsum("oi,nihw->nohw", w1, x), 0.0)
    h_res = jnp.einsum("oi,nihw->nohw", w2, h1)
    sc = jnp.einsum("oi,nihw->nohw", ws, x) + params["bs"][None, :, None, None]
    h_pre = h_res + sc
    mean = jnp.mean(h_pre, axis=(0, 2, 3), keepdims=True)
    var = jnp.mean((h_pre - mean) ** 2, axis=(0, 2, 3), keepdims=True)
    out = (h_pre - mean) * jax.lax.rsqrt(var + 1e-5)
    return out * params["gamma"][None, :, None, None] + params["beta"][None, :, None, None]


if __name__ == "__main__":
    key = jax.random.PRNGKey(0)
    k_x, k_p = jax.random.split(key)

    N, C_IN, C_OUT, H, W = 2, 4, 8, 16, 16
    x = jax.random.normal(k_x, (N, C_IN, H, W), jnp.float32)
    params = init_params(k_p, C_IN, C_OUT)

    out = jax.block_until_ready(fake_rkhs_forward(x, params))
    ref = _reference_forward(x, params)

    assert out.shape == (N, C_OUT, H, W)
    assert jnp.allclose(out, ref, atol=1e-3, rtol=1e-3), "mismatch vs JAX reference"

    print("KERNEL_OK")
</pallas_src>

<mosaic_0001>
module attributes {stable_mosaic.version = 11 : i64} {
  func.func @_stats_kernel(%arg0: i32, %arg1: i32, %arg2: memref<1x4x256xf32, #tpu.memory_space<vmem>>, %arg3: memref<16x4xf32, #tpu.memory_space<vmem>>, %arg4: memref<8x8xf32, #tpu.memory_space<vmem>>, %arg5: memref<1x1x8x2xf32, #tpu.memory_space<vmem>>) attributes {dimension_semantics = [#tpu.dimension_semantics<parallel>, #tpu.dimension_semantics<parallel>], iteration_bounds = array<i64: 2, 1>, scalar_prefetch = 0 : i64, scratch_operands = 0 : i64, tpu.core_type = #tpu.core_type<tc>, window_params = [{transform_indices = @transform_0, window_bounds = array<i64: 1, 4, 256>}, {pipeline_mode = #tpu.pipeline_mode<synchronous>, transform_indices = @transform_1, window_bounds = array<i64: 16, 4>}, {pipeline_mode = #tpu.pipeline_mode<synchronous>, transform_indices = @transform_2, window_bounds = array<i64: 8, 8>}, {transform_indices = @transform_3, window_bounds = array<i64: 1, 1, 8, 2>}]} {
    %c0 = arith.constant 0 : index
    %c0_0 = arith.constant 0 : index
    %c0_1 = arith.constant 0 : index
    %0 = vector.load %arg2[%c0, %c0_0, %c0_1] : memref<1x4x256xf32, #tpu.memory_space<vmem>>, vector<1x4x256xf32>
    %1 = vector.shape_cast %0 : vector<1x4x256xf32> to vector<4x256xf32>
    %c0_2 = arith.constant 0 : index
    %c0_3 = arith.constant 0 : index
    %2 = vector.load %arg3[%c0_2, %c0_3] : memref<16x4xf32, #tpu.memory_space<vmem>>, vector<16x4xf32>
    %cst = arith.constant dense<0.000000e+00> : vector<16x256xf32>
    %3 = tpu.matmul %2, %1, %cst {dimension_numbers = #tpu.dot_dimension_numbers<[1], [0], [0], [1], [0, 0, 1, 1], [], []>} : vector<16x4xf32>, vector<4x256xf32>, vector<16x256xf32> -> vector<16x256xf32>
    %4 = vector.extract_strided_slice %3 {offsets = [0, 0], sizes = [8, 256], strides = [1, 1]} : vector<16x256xf32> to vector<8x256xf32>
    %cst_4 = arith.constant 0.000000e+00 : f32
    %5 = vector.broadcast %cst_4 : f32 to vector<8x256xf32>
    %6 = arith.maximumf %4, %5 : vector<8x256xf32>
    %c0_5 = arith.constant 0 : index
    %c0_6 = arith.constant 0 : index
    %7 = vector.load %arg4[%c0_5, %c0_6] : memref<8x8xf32, #tpu.memory_space<vmem>>, vector<8x8xf32>
    %cst_7 = arith.constant dense<0.000000e+00> : vector<8x256xf32>
    %8 = tpu.matmul %7, %6, %cst_7 {dimension_numbers = #tpu.dot_dimension_numbers<[1], [0], [0], [1], [0, 0, 1, 1], [], []>} : vector<8x8xf32>, vector<8x256xf32>, vector<8x256xf32> -> vector<8x256xf32>
    %9 = vector.extract_strided_slice %3 {offsets = [8, 0], sizes = [8, 256], strides = [1, 1]} : vector<16x256xf32> to vector<8x256xf32>
    %10 = arith.addf %8, %9 : vector<8x256xf32>
    %cst_8 = arith.constant dense<0.000000e+00> : vector<8xf32>
    %11 = vector.multi_reduction <add>, %10, %cst_8 [1] : vector<8x256xf32> to vector<8xf32>
    %12 = vector.shape_cast %11 : vector<8xf32> to vector<8x1xf32>
    %13 = arith.mulf %10, %10 : vector<8x256xf32>
    %cst_9 = arith.constant dense<0.000000e+00> : vector<8xf32>
    %14 = vector.multi_reduction <add>, %13, %cst_9 [1] : vector<8x256xf32> to vector<8xf32>
    %15 = vector.shape_cast %14 : vector<8xf32> to vector<8x1xf32>
    %16 = tpu.concatenate %12, %15 in 1 : vector<8x1xf32>, vector<8x1xf32> -> vector<8x2xf32>
    %c0_10 = arith.constant 0 : index
    %c0_11 = arith.constant 0 : index
    %c0_12 = arith.constant 0 : index
    %c0_13 = arith.constant 0 : index
    %17 = vector.load %arg5[%c0_10, %c0_11, %c0_12, %c0_13] : memref<1x1x8x2xf32, #tpu.memory_space<vmem>>, vector<1x1x8x2xf32>
    %18 = vector.shape_cast %17 : vector<1x1x8x2xf32> to vector<8x2xf32>
    %19 = vector.shape_cast %16 : vector<8x2xf32> to vector<1x1x8x2xf32>
    tpu.vector_store %arg5[%c0_10, %c0_11, %c0_12, %c0_13], %19 {strides = array<i32>} : memref<1x1x8x2xf32, #tpu.memory_space<vmem>>, vector<1x1x8x2xf32>,
    return
  }
  func.func @transform_0(%arg0: i32, %arg1: i32) -> (i32, i32, i32) {
    %c0_i32 = arith.constant 0 : i32
    %c0_i32_0 = arith.constant 0 : i32
    return %arg0, %c0_i32, %arg1 : i32, i32, i32
  }
  func.func @transform_1(%arg0: i32, %arg1: i32) -> (i32, i32) {
    %c0_i32 = arith.constant 0 : i32
    %c0_i32_0 = arith.constant 0 : i32
    %c0_i32_1 = arith.constant 0 : i32
    return %c0_i32, %c0_i32_0 : i32, i32
  }
  func.func @transform_2(%arg0: i32, %arg1: i32) -> (i32, i32) {
    %c0_i32 = arith.constant 0 : i32
    %c0_i32_0 = arith.constant 0 : i32
    %c0_i32_1 = arith.constant 0 : i32
    return %c0_i32, %c0_i32_0 : i32, i32
  }
  func.func @transform_3(%arg0: i32, %arg1: i32) -> (i32, i32, i32, i32) {
    %c0_i32 = arith.constant 0 : i32
    %c0_i32_0 = arith.constant 0 : i32
    %c0_i32_1 = arith.constant 0 : i32
    return %arg0, %arg1, %c0_i32, %c0_i32_0 : i32, i32, i32, i32
  }
}

</mosaic_0001>

<llo_original>
// kernel: tpu_custom_call.1
$region0: #{tpu_custom_call.1}
  #allocation0 [shape = 'u32[]', space=smem, size = 0x4, offset = 0x4, fixed_abs, tag = 'smem constant byte address 0x4 - core index']
  #allocation1 [shape = 'u32[144,128]{1,0:T(1,128)}', space=vmem, size = 0x12000, scoped, tag = 'internal scratch']
  %s0 = inlined_call_operand.vmem [shape: f32[2,4,256], index: 0, kind: input, shape index: {}]
  %s1 = inlined_call_operand.vmem [shape: f32[16,4], index: 1, kind: input, shape index: {}]
  %s2 = inlined_call_operand.vmem [shape: f32[8,8], index: 2, kind: input, shape index: {}]
  %s3 = inlined_call_operand.vmem [shape: f32[2,1,8,2], index: 3, kind: output, shape index: {}]
  %s4 = sld [smem:[#allocation0]]
  $region45: #{tpu_custom_call.1} parent=0
    _
  %s6 = ssub.s32 1, %s4
  %s7 = scalar_select 0, %s6, %s4
  loop: start=0, step=1, limit=4
  $region2: #{tpu_custom_call.1} parent=0 // loop_pre_header
    _
  $region3: #{tpu_custom_call.1} parent=0 // loop_header
    %s9 = sphi 0, %s13
    %p10 = scmp.ge.s32.totalorder %s9, 4
    %s16 = sphi 0, %s28
    %s17 = sphi 0, %s24
    %s18 = sphi 0, %s16
    %s19 = sphi 0, %s17
    %s20 = sphi 0, %s18
    %s21 = sphi 0, %s19
    %s33 = sphi 0, %s35
    %s36 = sphi 0, %s33
    %s37 = sphi 0, %s36
    %s53 = sphi 0, %s37
    %s57 = sphi 0, %s57
    %s59 = sphi 0, %s57
    %s60 = sphi 0, %s59
    %s74 = sphi 0, %s60
    %s78 = sphi 0, %s78
    %s80 = sphi 0, %s78
    %s81 = sphi 0, %s80
    %s95 = sphi 0, %s81
    %s103 = sphi 0, %s105
    %s106 = sphi 0, %s103
    %s107 = sphi 0, %s106
    %s123 = sphi 0, %s107
  $region4: #{tpu_custom_call.1} parent=0 // loop_header_branch
    %12 = sbr.rel (%p10) target = $region8
  $region5: #{tpu_custom_call.1} parent=0 // loop_body
    %s14 = ssub.s32 %s9, 1
    %s15 = ssub.s32 %s9, 2
    %s22 = sadd.s32 1, %s17
    %p23 = scmp.ge.s32.totalorder %s22, 1
    %s24 = scalar_select %p23, 0, %s22
    %s25 = sadd.s32 1, %s16
    %s26 = scalar_select %p23, %s25, %s16
    %p27 = scmp.ge.s32.totalorder %s26, 2
    %s28 = scalar_select %p27, 0, %s26
    %s29 = ssub.s32 %s16, %s28
    %s30 = ssub.s32 %s17, %s24
    %s31 = sor.u32 %s29, %s30
    %p32 = scmp.eq.s32.totalorder %s31, 0
    %s34 = sadd.s32 %s33, 1
    %s35 = scalar_select %p32, %s33, %s34
    %p38 = pneg %p32
    %p39 = scmp.eq.s32.totalorder %s9, 1
    %p40 = por %p38, %p39
    %p41 = scmp.ne.s32.totalorder %s33, %s36
    %p42 = scmp.eq.s32.totalorder %s9, 0
    %p43 = por %p41, %p42
    %p44 = scmp.ne.s32.totalorder %s33, %s36
    %p45 = scmp.eq.s32.totalorder %s14, 1
    %p46 = por %p44, %p45
    %p47 = scmp.ne.s32.totalorder %s36, %s37
    %p48 = scmp.eq.s32.totalorder %s14, 0
    %p49 = por %p47, %p48
    %p50 = scmp.ne.s32.totalorder %s36, %s37
    %p51 = scmp.eq.s32.totalorder %s15, 1
    %p52 = por %p50, %p51
    %p54 = scmp.ne.s32.totalorder %s37, %s53
    %p55 = scmp.eq.s32.totalorder %s15, 0
    %p56 = por %p54, %p55
    %s58 = sadd.s32 %s57, 1
    %p61 = scmp.eq.s32.totalorder %s9, 1
    %p62 = scmp.ne.s32.totalorder %s57, %s59
    %p63 = scmp.eq.s32.totalorder %s9, 0
    %p64 = por %p62, %p63
    %p65 = scmp.ne.s32.totalorder %s57, %s59
    %p66 = scmp.eq.s32.totalorder %s14, 1
    %p67 = por %p65, %p66
    %p68 = scmp.ne.s32.totalorder %s59, %s60
    %p69 = scmp.eq.s32.totalorder %s14, 0
    %p70 = por %p68, %p69
    %p71 = scmp.ne.s32.totalorder %s59, %s60
    %p72 = scmp.eq.s32.totalorder %s15, 1
    %p73 = por %p71, %p72
    %p75 = scmp.ne.s32.totalorder %s60, %s74
    %p76 = scmp.eq.s32.totalorder %s15, 0
    %p77 = por %p75, %p76
    %s79 = sadd.s32 %s78, 1
    %p82 = scmp.eq.s32.totalorder %s9, 1
    %p83 = scmp.ne.s32.totalorder %s78, %s80
    %p84 = scmp.eq.s32.totalorder %s9, 0
    %p85 = por %p83, %p84
    %p86 = scmp.ne.s32.totalorder %s78, %s80
    %p87 = scmp.eq.s32.totalorder %s14, 1
    %p88 = por %p86, %p87
    %p89 = scmp.ne.s32.totalorder %s80, %s81
    %p90 = scmp.eq.s32.totalorder %s14, 0
    %p91 = por %p89, %p90
    %p92 = scmp.ne.s32.totalorder %s80, %s81
    %p93 = scmp.eq.s32.totalorder %s15, 1
    %p94 = por %p92, %p93
    %p96 = scmp.ne.s32.totalorder %s81, %s95
    %p97 = scmp.eq.s32.totalorder %s15, 0
    %p98 = por %p96, %p97
    %s99 = ssub.s32 %s16, %s28
    %s100 = ssub.s32 %s17, %s24
    %s101 = sor.u32 %s99, %s100
    %p102 = scmp.eq.s32.totalorder %s101, 0
    %s104 = sadd.s32 %s103, 1
    %s105 = scalar_select %p102, %s103, %s104
    %p108 = pneg %p102
    %p109 = scmp.eq.s32.totalorder %s9, 1
    %p110 = por %p108, %p109
    %p111 = scmp.ne.s32.totalorder %s103, %s106
    %p112 = scmp.eq.s32.totalorder %s9, 0
    %p113 = por %p111, %p112
    %p114 = scmp.ne.s32.totalorder %s103, %s106
    %p115 = scmp.eq.s32.totalorder %s14, 1
    %p116 = por %p114, %p115
    %p117 = scmp.ne.s32.totalorder %s106, %s107
    %p118 = scmp.eq.s32.totalorder %s14, 0
    %p119 = por %p117, %p118
    %p120 = scmp.ne.s32.totalorder %s106, %s107
    %p121 = scmp.eq.s32.totalorder %s15, 1
    %p122 = por %p120, %p121
    %p124 = scmp.ne.s32.totalorder %s107, %s123
    %p125 = scmp.eq.s32.totalorder %s15, 0
    %p126 = por %p124, %p125
    %p127 = scmp.le.s32.totalorder 1, %s9
    %p128 = scmp.lt.s32.totalorder %s9, 3
    %p129 = pnand %p127, %p128
    %p130 = pneg %p129
    // Predicated region
    $region9: #{tpu_custom_call.1} parent=5 // pred_check
      _
    $region10: #{tpu_custom_call.1} parent=5 // pred_check_branch
      %132 = sbr.rel (%p129) target = $region12
    $region11: #{tpu_custom_call.1} parent=5 // pred_region
      %s133 = ssub.s32 %s9, 1
      // Predicated region
      $region13: #{tpu_custom_call.1} parent=11 // pred_check
        %p134 = pneg %p70
      $region14: #{tpu_custom_call.1} parent=11 // pred_check_branch
        %136 = sbr.rel (%p134) target = $region16
      $region15: #{tpu_custom_call.1} parent=11 // pred_region
        _
      $region16: #{tpu_custom_call.1} parent=11 // pred_fallthru
        _
      // Predicated region
      $region17: #{tpu_custom_call.1} parent=11 // pred_check
        %p137 = pneg %p91
      $region18: #{tpu_custom_call.1} parent=11 // pred_check_branch
        %139 = sbr.rel (%p137) target = $region20
      $region19: #{tpu_custom_call.1} parent=11 // pred_region
        _
      $region20: #{tpu_custom_call.1} parent=11 // pred_fallthru
        _
    $region12: #{tpu_custom_call.1} parent=5 // pred_fallthru
      _
    %p140 = scmp.lt.s32.totalorder %s9, 2
    // Predicated region
    $region21: #{tpu_custom_call.1} parent=5 // pred_check
      %p141 = pneg %p140
    $region22: #{tpu_custom_call.1} parent=5 // pred_check_branch
      %143 = sbr.rel (%p141) target = $region24
    $region23: #{tpu_custom_call.1} parent=5 // pred_region
      // Predicated region
      $region25: #{tpu_custom_call.1} parent=23 // pred_check
        %p144 = pneg %p43
      $region26: #{tpu_custom_call.1} parent=23 // pred_check_branch
        %146 = sbr.rel (%p144) target = $region28
      $region27: #{tpu_custom_call.1} parent=23 // pred_region
        %s147 = smul.u32 2, %s17
        %p148 = scmp.lt.s32.totalorder %s16, 1
        %s149 = scalar_select %p148, %s16, 1
        %p150 = scmp.lt.s32.totalorder %s147, 1
        %s151 = scalar_select %p150, %s147, 1
        %s152 = smul.addr %s149, 2
        %s153 = sadd.s32 %s151, %s152
        %s154 = smul.addr %s153, 4
        %s155 = scalar_lea.vmem %s0, %s154
        %s156 = smul.u32 2, %s17
      $region28: #{tpu_custom_call.1} parent=23 // pred_fallthru
        _
    $region24: #{tpu_custom_call.1} parent=5 // pred_fallthru
      _
    %p157 = scmp.le.s32.totalorder 1, %s9
    %p158 = scmp.lt.s32.totalorder %s9, 3
    %p159 = pnand %p157, %p158
    %p160 = pneg %p159
    // Predicated region
    $region29: #{tpu_custom_call.1} parent=5 // pred_check
      _
    $region30: #{tpu_custom_call.1} parent=5 // pred_check_branch
      %162 = sbr.rel (%p159) target = $region32
    $region31: #{tpu_custom_call.1} parent=5 // pred_region
      %s163 = ssub.s32 %s9, 1
      %s164 = smul.u32 2, %s19
      %p165 = scmp.lt.s32.totalorder %s18, 1
      %s166 = scalar_select %p165, %s18, 1
      %p167 = scmp.lt.s32.totalorder %s164, 1
      %s168 = scalar_select %p167, %s164, 1
      %s169 = smul.addr %s166, 2
      %s170 = sadd.s32 %s168, %s169
      %s171 = smul.addr %s170, 4
      %s172 = scalar_lea.vmem %s0, %s171
      %p173 = pneg %p49
      %p174 = pneg %p46
      %p175 = pneg %p70
      %p176 = pneg %p67
      %p177 = pneg %p91
      %p178 = pneg %p88
      %p179 = pneg %p119
      %p180 = pneg %p116
      %p181 = scmp.lt.s32.totalorder %s18, 1
      %s182 = scalar_select %p181, %s18, 1
      %p183 = scmp.lt.s32.totalorder %s19, 0
      %s184 = scalar_select %p183, %s19, 0
      %s185 = sadd.s32 %s184, %s182
      %s186 = smul.addr %s185, 8
      %s187 = scalar_lea.vmem %s3, %s186
      %s188 = smul.u32 2, %s19
      %p189 = scmp.lt.s32.totalorder %s18, 1
      %s190 = scalar_select %p189, %s18, 1
      %p191 = scmp.lt.s32.totalorder %s188, 1
      %s192 = scalar_select %p191, %s188, 1
      %s193 = smul.addr %s190, 2
      %s194 = sadd.s32 %s192, %s193
      %s195 = smul.addr %s194, 4
      %s196 = scalar_lea.vmem %s0, %s195
      %s197 = smul.u32 2, %s19
      %p198 = scmp.lt.s32.totalorder %s18, 1
      %s199 = scalar_select %p198, %s18, 1
      %p200 = scmp.lt.s32.totalorder %s19, 0
      %s201 = scalar_select %p200, %s19, 0
      %s202 = sadd.s32 %s201, %s199
      %s203 = smul.addr %s202, 8
      %s204 = scalar_lea.vmem %s3, %s203
      %v205 = vld [vmem:[%s196] sm:$0xff]
      %v206 = vld [vmem:[%s1] sm:$0xff]
      %v207 = vld [vmem:[%s1 + $0x8] sm:$0xff]
      %v209 = vcombine.high %v205, %v205
      %vm210 = vcmask 31744
      %v212 = vsel %vm210, %v206, 0
      %v215 = vsel %vm210, %v207, 0
      %vm217 = vcmask 1043456
      %v218 = vsel %vm217, %v205, 0
      %v220 = vsel %vm217, %v209, 0
      %222 = vmatprep.subr.mxu0 %v220
      %223 = vmatpush1.msra.mxu0 %v218
      %224 = vmatprep.subr.mxu0 0.0
      %225 = vmatpush1.msra.mxu0 0.0
      %226 = vmatprep.subr.mxu0 0.0
      %227 = vmatpush1.msra.mxu0 0.0
      %228 = vmatprep.subr.mxu0 0.0
      %229 = vmatpush1.msra.mxu0 0.0
      %230 = vmatprep.subr.mxu0 0.0
      %231 = vmatpush1.msra.mxu0 0.0
      %232 = vmatprep.subr.mxu0 0.0
      %233 = vmatpush1.msra.mxu0 0.0
      %234 = vmatprep.subr.mxu0 0.0
      %235 = vmatpush1.msra.mxu0 0.0
      %236 = vmatprep.subr.mxu0 0.0
      %237 = vmatpush1.msra.mxu0 0.0
      %238 = vmatprep.subr.mxu0 0.0
      %239 = vmatpush1.msra.mxu0 0.0
      %240 = vmatprep.subr.mxu0 0.0
      %241 = vmatpush1.msra.mxu0 0.0
      %242 = vmatprep.subr.mxu0 0.0
      %243 = vmatpush1.msra.mxu0 0.0
      %244 = vmatprep.subr.mxu0 0.0
      %245 = vmatpush1.msra.mxu0 0.0
      %246 = vmatprep.subr.mxu0 0.0
      %247 = vmatpush1.msra.mxu0 0.0
      %248 = vmatprep.subr.mxu0 0.0
      %249 = vmatpush1.msra.mxu0 0.0
      %250 = vmatprep.subr.mxu0 0.0
      %251 = vmatpush1.msra.mxu0 0.0
      %252 = vmatprep.subr.mxu0 0.0
      %253 = vmatpush1.msra.mxu0 0.0
      %254 = vmatprep.subr.mxu0 0.0
      %255 = vmatpush1.msra.mxu0 0.0
      %256 = vmatprep.subr.mxu0 0.0
      %257 = vmatpush1.msra.mxu0 0.0
      %258 = vmatprep.subr.mxu0 0.0
      %259 = vmatpush1.msra.mxu0 0.0
      %260 = vmatprep.subr.mxu0 0.0
      %261 = vmatpush1.msra.mxu0 0.0
      %262 = vmatprep.subr.mxu0 0.0
      %263 = vmatpush1.msra.mxu0 0.0
      %264 = vmatprep.subr.mxu0 0.0
      %265 = vmatpush1.msra.mxu0 0.0
      %266 = vmatprep.subr.mxu0 0.0
      %267 = vmatpush1.msra.mxu0 0.0
      %268 = vmatprep.subr.mxu0 0.0
      %269 = vmatpush1.msra.mxu0 0.0
      %270 = vmatprep.subr.mxu0 0.0
      %271 = vmatpush1.msra.mxu0 0.0
      %272 = vmatprep.subr.mxu0 0.0
      %273 = vmatpush1.msra.mxu0 0.0
      %274 = vmatprep.subr.mxu0 0.0
      %275 = vmatpush1.msra.mxu0 0.0
      %276 = vmatprep.subr.mxu0 0.0
      %277 = vmatpush1.msra.mxu0 0.0
      %278 = vmatprep.subr.mxu0 0.0
      %279 = vmatpush1.msra.mxu0 0.0
      %280 = vmatprep.subr.mxu0 0.0
      %281 = vmatpush1.msra.mxu0 0.0
      %282 = vmatprep.subr.mxu0 0.0
      %283 = vmatpush1.msra.mxu0 0.0
      %284 = vmatprep.subr.mxu0 0.0
      %285 = vmatpush1.msra.mxu0 0.0
      %286 = vmatprep.mubr.f32.mxu0 0.0
      %287 = vmatmul.mubr.f32.gmra.mrb[0].mxu0 %v212
      %v288 = vpop.f32.mrb[0].mxu0
      %v289 = vadd.f32 0.0, %v288
      %v290 = vpop.f32.mrb[0].mxu0
      %v291 = vadd.f32 0.0, %v290
      %292 = vmatprep.mubr.f32.mxu0 0.0
      %293 = vmatmul.mubr.f32.gmra.mrb[0].mxu0 %v215
      %v294 = vpop.f32.mrb[0].mxu0
      %v295 = vadd.f32 0.0, %v294
      %v296 = vpop.f32.mrb[0].mxu0
      %v297 = vadd.f32 0.0, %v296
      %298 = vdwg.mxu0
      %v299 = vmax.f32 %v289, 0.0
      %v300 = vmax.f32 %v291, 0.0
      %v301 = vld [vmem:[%s2] sm:$0xff]
      %vm302 = vcmask 64512
      %v304 = vsel %vm302, %v301, 0
      %306 = vmatprep.subr.mxu0 %v300
      %307 = vmatpush1.msra.mxu0 %v299
      %308 = vmatprep.subr.mxu0 0.0
      %309 = vmatpush1.msra.mxu0 0.0
      %310 = vmatprep.subr.mxu0 0.0
      %311 = vmatpush1.msra.mxu0 0.0
      %312 = vmatprep.subr.mxu0 0.0
      %313 = vmatpush1.msra.mxu0 0.0
      %314 = vmatprep.subr.mxu0 0.0
      %315 = vmatpush1.msra.mxu0 0.0
      %316 = vmatprep.subr.mxu0 0.0
      %317 = vmatpush1.msra.mxu0 0.0
      %318 = vmatprep.subr.mxu0 0.0
      %319 = vmatpush1.msra.mxu0 0.0
      %320 = vmatprep.subr.mxu0 0.0
      %321 = vmatpush1.msra.mxu0 0.0
      %322 = vmatprep.subr.mxu0 0.0
      %323 = vmatpush1.msra.mxu0 0.0
      %324 = vmatprep.subr.mxu0 0.0
      %325 = vmatpush1.msra.mxu0 0.0
      %326 = vmatprep.subr.mxu0 0.0
      %327 = vmatpush1.msra.mxu0 0.0
      %328 = vmatprep.subr.mxu0 0.0
      %329 = vmatpush1.msra.mxu0 0.0
      %330 = vmatprep.subr.mxu0 0.0
      %331 = vmatpush1.msra.mxu0 0.0
      %332 = vmatprep.subr.mxu0 0.0
      %333 = vmatpush1.msra.mxu0 0.0
      %334 = vmatprep.subr.mxu0 0.0
      %335 = vmatpush1.msra.mxu0 0.0
      %336 = vmatprep.subr.mxu0 0.0
      %337 = vmatpush1.msra.mxu0 0.0
      %338 = vmatprep.subr.mxu0 0.0
      %339 = vmatpush1.msra.mxu0 0.0
      %340 = vmatprep.subr.mxu0 0.0
      %341 = vmatpush1.msra.mxu0 0.0
      %342 = vmatprep.subr.mxu0 0.0
      %343 = vmatpush1.msra.mxu0 0.0
      %344 = vmatprep.subr.mxu0 0.0
      %345 = vmatpush1.msra.mxu0 0.0
      %346 = vmatprep.subr.mxu0 0.0
      %347 = vmatpush1.msra.mxu0 0.0
      %348 = vmatprep.subr.mxu0 0.0
      %349 = vmatpush1.msra.mxu0 0.0
      %350 = vmatprep.subr.mxu0 0.0
      %351 = vmatpush1.msra.mxu0 0.0
      %352 = vmatprep.subr.mxu0 0.0
      %353 = vmatpush1.msra.mxu0 0.0
      %354 = vmatprep.subr.mxu0 0.0
      %355 = vmatpush1.msra.mxu0 0.0
      %356 = vmatprep.subr.mxu0 0.0
      %357 = vmatpush1.msra.mxu0 0.0
      %358 = vmatprep.subr.mxu0 0.0
      %359 = vmatpush1.msra.mxu0 0.0
      %360 = vmatprep.subr.mxu0 0.0
      %361 = vmatpush1.msra.mxu0 0.0
      %362 = vmatprep.subr.mxu0 0.0
      %363 = vmatpush1.msra.mxu0 0.0
      %364 = vmatprep.subr.mxu0 0.0
      %365 = vmatpush1.msra.mxu0 0.0
      %366 = vmatprep.subr.mxu0 0.0
      %367 = vmatpush1.msra.mxu0 0.0
      %368 = vmatprep.subr.mxu0 0.0
      %369 = vmatpush1.msra.mxu0 0.0
      %370 = vmatprep.mubr.f32.mxu0 0.0
      %371 = vmatmul.mubr.f32.gmra.mrb[0].mxu0 %v304
      %v372 = vpop.f32.mrb[0].mxu0
      %v373 = vadd.f32 %v295, %v372
      %v374 = vpop.f32.mrb[0].mxu0
      %v375 = vadd.f32 %v297, %v374
      %376 = vdwg.mxu0
      %v377 = vadd.f32 %v373, %v375
      %378 = vadd.xlane.f32.xlu0 %v377
      %v379 = vpop.xlane.xlu0 %378
      %v380 = vmul.f32 %v373, %v373
      %v381 = vmul.f32 %v375, %v375
      %v382 = vadd.f32 %v380, %v381
      %383 = vadd.xlane.f32.xlu0 %v382
      %v384 = vpop.xlane.xlu0 %383
      %vm385 = vcmask 7168
      %v386 = vsel %vm385, %v379, %v384
      %vm387 = vcmask 15360
      %388 = vst.msk [vmem:[%s204] sm:$0xff] %vm387, %v386
      %p389 = scmp.lt.s32.totalorder %s18, 1
      %s390 = scalar_select %p389, %s18, 1
      %p391 = scmp.lt.s32.totalorder %s19, 0
      %s392 = scalar_select %p391, %s19, 0
      %s393 = sadd.s32 %s392, %s390
      %s394 = smul.addr %s393, 8
      %s395 = scalar_lea.vmem %s3, %s394
      // Predicated region
      $region33: #{tpu_custom_call.1} parent=31 // pred_check
        %p396 = pneg %p116
      $region34: #{tpu_custom_call.1} parent=31 // pred_check_branch
        %398 = sbr.rel (%p396) target = $region36
      $region35: #{tpu_custom_call.1} parent=31 // pred_region
        _
      $region36: #{tpu_custom_call.1} parent=31 // pred_fallthru
        _
    $region32: #{tpu_custom_call.1} parent=5 // pred_fallthru
      _
    %p399 = scmp.le.s32.totalorder 2, %s9
    // Predicated region
    $region37: #{tpu_custom_call.1} parent=5 // pred_check
      %p400 = pneg %p399
    $region38: #{tpu_custom_call.1} parent=5 // pred_check_branch
      %402 = sbr.rel (%p400) target = $region40
    $region39: #{tpu_custom_call.1} parent=5 // pred_region
      %s403 = ssub.s32 %s9, 2
      // Predicated region
      $region41: #{tpu_custom_call.1} parent=39 // pred_check
        %p404 = pneg %p122
      $region42: #{tpu_custom_call.1} parent=39 // pred_check_branch
        %406 = sbr.rel (%p404) target = $region44
      $region43: #{tpu_custom_call.1} parent=39 // pred_region
        %p407 = scmp.lt.s32.totalorder %s20, 1
        %s408 = scalar_select %p407, %s20, 1
        %p409 = scmp.lt.s32.totalorder %s21, 0
        %s410 = scalar_select %p409, %s21, 0
        %s411 = sadd.s32 %s410, %s408
        %s412 = smul.addr %s411, 8
        %s413 = scalar_lea.vmem %s3, %s412
      $region44: #{tpu_custom_call.1} parent=39 // pred_fallthru
        _
    $region40: #{tpu_custom_call.1} parent=5 // pred_fallthru
      _
  $region6: #{tpu_custom_call.1} parent=0 // loop_footer
    %s13 = sadd.s32 1, %s9
  $region7: #{tpu_custom_call.1} parent=0 // loop_footer_branch
    %8 = sbr.rel target = $region3
  $region8: #{tpu_custom_call.1} parent=0 // loop_exit
    _

</llo_original>
